<compile_context>
chip_gen: v5e
topology: v5e:2x2
jax: 0.10.0
libtpu: 0.0.40
codegen_flags: <defaults>
</compile_context>

<pallas_src>
import functools

import jax
import jax.numpy as jnp
from jax import lax
from jax.experimental import pallas as pl
from jax.experimental.pallas import tpu as pltpu


def _focal_loss_kernel(*refs, gamma, eps, smooth, has_alpha, masked,
                       hw_tile, hw_valid, splits, tiles_per_split):
    if has_alpha:
        tgt_ref, x_ref, alpha_ref, sumf_ref, suma_ref, accf_ref, acca_ref = refs
    else:
        tgt_ref, x_ref, sumf_ref, accf_ref = refs
        alpha_ref = suma_ref = acca_ref = None

    j = pl.program_id(1)

    @pl.when(j == 0)
    def _init():
        accf_ref[...] = jnp.zeros_like(accf_ref)
        if has_alpha:
            acca_ref[...] = jnp.zeros_like(acca_ref)

    x = x_ref[...]                                          # (C, hw_tile) native dtype
    tgt = tgt_ref[...].astype(jnp.int32)                    # (1, hw_tile)
    c = x.shape[0]

    # One-hot of the target along the class (sublane) axis: a (C, 1) iota
    # column broadcast against the (1, hw_tile) target row -- avoids a full
    # (C, hw_tile) int32 iota temporary.
    cls_col = lax.broadcasted_iota(jnp.int32, (c, 1), 0)
    onehot = cls_col == tgt                                 # (C, hw_tile) bool

    # log-sum-exp softmax over classes.  max and the target gather are exact
    # in the native dtype; only the exp/sum path runs in f32.
    m = jnp.max(x, axis=0, keepdims=True).astype(jnp.float32)       # (1, hw_tile)
    s = jnp.sum(jnp.exp(x.astype(jnp.float32) - m), axis=0, keepdims=True)
    lse = m + jnp.log(s)
    x_t = jnp.sum(jnp.where(onehot, x, jnp.zeros_like(x)),
                  axis=0, keepdims=True).astype(jnp.float32)
    p_t = jnp.exp(x_t - lse)                                # softmax prob of target

    if smooth is not None:
        # clamp(one_hot, smooth, 1-smooth): (1-smooth) on target, smooth elsewhere
        pt = smooth + (1.0 - 2.0 * smooth) * p_t + eps
    else:
        pt = p_t + eps
    logpt = jnp.log(pt)

    g_int = int(gamma)
    if float(g_int) == float(gamma) and 0 <= g_int <= 8:
        if g_int == 0:
            fp = jnp.ones_like(pt)
        else:
            omp = 1.0 - pt                                  # matches reference exactly
            fp = omp
            for _ in range(g_int - 1):                      # gamma==2 -> one mul
                fp = fp * omp
    else:
        # non-integer gamma: guard the log (PyTorch would NaN if pt > 1)
        omp = jnp.maximum(1.0 - pt, 1e-30)
        fp = jnp.exp(gamma * jnp.log(omp))

    focal = -fp * logpt                                     # (1, hw_tile)

    if has_alpha:
        a_t = jnp.sum(jnp.where(onehot, alpha_ref[...], 0.0),
                      axis=0, keepdims=True)                # gathered alpha per lane

    if masked:
        # zero out lanes that are HW padding
        if splits > 1:
            tile_idx = (pl.program_id(0) % splits) * tiles_per_split + j
        else:
            tile_idx = j
        lane = lax.broadcasted_iota(jnp.int32, (1, hw_tile), 1) + tile_idx * hw_tile
        valid = lane < hw_valid
        focal = jnp.where(valid, focal, 0.0)
        if has_alpha:
            a_t = jnp.where(valid, a_t, 0.0)

    accf_ref[...] += focal
    if has_alpha:
        acca_ref[...] += a_t

    @pl.when(j == pl.num_programs(1) - 1)
    def _finalize():
        sumf_ref[...] = jnp.sum(accf_ref[...]).reshape(1, 1)
        if has_alpha:
            suma_ref[...] = jnp.sum(acca_ref[...]).reshape(1, 1)


def _round_up(x, m):
    return ((x + m - 1) // m) * m


def _per_lane_bytes(c, x_itemsize, t_itemsize, has_alpha):
    """Estimated VMEM bytes per lane column of one HW tile: double-buffered
    logits/targets, f32 accumulator scratch, and ~4 full-tile f32 temporaries
    that Mosaic materializes because a big tile exceeds the 64-vreg file."""
    n_f32_temps = 4 + (1 if has_alpha else 0)
    b = c * (2 * x_itemsize + 4 * n_f32_temps)   # logits (x2 buffers) + (C,hw) temps
    b += 2 * t_itemsize                          # target block (x2 buffers)
    b += 4 * (2 if has_alpha else 1)             # f32 accumulator scratch row(s)
    return b


def _pick_hw_tile(hw, per_lane_bytes, budget_bytes):
    """Largest lane tile (multiple of 128) whose estimated footprint fits budget."""
    cap = max(128, (budget_bytes // per_lane_bytes) // 128 * 128)
    hw128 = _round_up(hw, 128)
    if hw128 <= cap:
        return hw128                             # single (possibly padded) tile
    if hw % 128 == 0:
        best, t = 128, 256                       # prefer an exact divisor: no padding
        while t <= cap:
            if hw % t == 0:
                best = t
            t += 128
        return best
    return cap                                   # pad hw up to a multiple of cap


# Total per-grid-step VMEM footprint target.  Safe on v7x (64 MiB physical VMEM)
# while still giving multi-MiB logits blocks on v5e/v6e (128 MiB).
_DEFAULT_VMEM_BUDGET = 40 << 20


def focal_loss(x, target, num_class, alpha=None, gamma=2.0, balance_index=-1,
               smooth=None, size_average=True, hw_tile=None,
               vmem_budget_bytes=_DEFAULT_VMEM_BUDGET):
    """Pallas TPU implementation of FocalLoss.forward."""
    N, C = x.shape[0], x.shape[1]
    assert C == num_class
    if smooth is not None and (smooth < 0.0 or smooth > 1.0):
        raise ValueError('smooth value should be in [0,1]')

    # ---- alpha setup (mirrors FocalLoss.__init__) ----
    if alpha is None:
        alpha_col = None                        # all-ones => sum_i alpha[t_i] == M
    elif isinstance(alpha, float):
        a = jnp.full((num_class,), 1.0 - alpha, dtype=jnp.float32)
        a = a.at[balance_index].set(alpha)
        alpha_col = a.reshape(num_class, 1)
    else:
        a = jnp.asarray(alpha, dtype=jnp.float32).reshape(num_class)
        alpha_col = (a / jnp.sum(a)).reshape(num_class, 1)
    has_alpha = alpha_col is not None

    # ---- layout glue ----
    if x.ndim > 2:
        hw = 1
        for d in x.shape[2:]:
            hw *= d
        logits = x.reshape(N, C, hw)            # contiguous reshape only
        tgt = target.reshape(N, 1, hw)          # native integer dtype, no astype pass
        nb = N
    else:
        # (N, C): one small transpose so N becomes the lane axis.
        # TODO(synk): costs one extra HBM pass over the logits for the 2D case.
        logits = x.T.reshape(1, C, N)
        tgt = target.reshape(1, 1, N)
        nb, hw = 1, N

    M = nb * hw                                  # number of valid samples

    x_itemsize = jnp.dtype(logits.dtype).itemsize
    t_itemsize = jnp.dtype(tgt.dtype).itemsize
    per_lane = _per_lane_bytes(C, x_itemsize, t_itemsize, has_alpha)
    if hw_tile is None:
        hw_tile = _pick_hw_tile(hw, per_lane, vmem_budget_bytes)
    hw_tile = _round_up(hw_tile, 128)

    # v7x megacore: if there is only one batch row and it fits one tile, split
    # it in two so the "parallel" axis has >= 2 entries (when it splits cleanly).
    if nb == 1 and hw_tile >= 256 and _round_up(hw, hw_tile) == hw_tile:
        half = hw_tile // 2
        if half % 128 == 0:
            hw_tile = half

    # Pad HW to a multiple of the tile; padded lanes are masked inside the kernel.
    hw_pad = _round_up(hw, hw_tile)
    masked = hw_pad != hw
    if masked:
        pad = hw_pad - hw
        logits = jnp.pad(logits, ((0, 0), (0, 0), (0, pad)))
        tgt = jnp.pad(tgt, ((0, 0), (0, 0), (0, pad)))
    n_tiles = hw_pad // hw_tile

    # Split HW tiles across an extra "parallel" factor when nb == 1 (v7x: 2 TCs).
    splits = 2 if (nb == 1 and n_tiles >= 2 and n_tiles % 2 == 0) else 1
    tiles_per_split = n_tiles // splits
    grid = (nb * splits, tiles_per_split)

    if splits > 1:
        def data_map(p, j, _t=tiles_per_split, _s=splits):
            return (p // _s, 0, (p % _s) * _t + j)
    else:
        def data_map(p, j):
            return (p, 0, j)

    kernel = functools.partial(
        _focal_loss_kernel, gamma=float(gamma), eps=1e-10, smooth=smooth,
        has_alpha=has_alpha, masked=masked, hw_tile=hw_tile, hw_valid=hw,
        splits=splits, tiles_per_split=tiles_per_split)

    in_specs = [
        pl.BlockSpec((None, 1, hw_tile), data_map),     # targets (native int dtype)
        pl.BlockSpec((None, C, hw_tile), data_map),     # logits (native dtype)
    ]
    inputs = [tgt, logits]
    scratch = [pltpu.VMEM((1, hw_tile), jnp.float32)]   # focal partial sums

    out_map = lambda p, j: (p, 0, 0)
    if has_alpha:
        in_specs.append(pl.BlockSpec((C, 1), lambda p, j: (0, 0)))   # alpha column
        inputs.append(alpha_col)
        out_shapes = (jax.ShapeDtypeStruct((nb * splits, 1, 1), jnp.float32),
                      jax.ShapeDtypeStruct((nb * splits, 1, 1), jnp.float32))
        out_specs = (pl.BlockSpec((None, 1, 1), out_map),
                     pl.BlockSpec((None, 1, 1), out_map))
        scratch.append(pltpu.VMEM((1, hw_tile), jnp.float32))        # alpha partials
    else:
        out_shapes = jax.ShapeDtypeStruct((nb * splits, 1, 1), jnp.float32)
        out_specs = pl.BlockSpec((None, 1, 1), out_map)

    # Scoped VMEM limit: v5e's default is only 16 MiB; keep below v7x's 64 MiB.
    footprint = per_lane * hw_tile + (4 << 20)
    vmem_limit = int(min(max(footprint, 32 << 20), 48 << 20))

    outs = pl.pallas_call(
        kernel,
        out_shape=out_shapes,
        grid_spec=pltpu.PrefetchScalarGridSpec(
            num_scalar_prefetch=0,
            grid=grid,
            in_specs=in_specs,
            out_specs=out_specs,
            scratch_shapes=scratch,
        ),
        compiler_params=pltpu.CompilerParams(
            dimension_semantics=("parallel", "arbitrary"),
            vmem_limit_bytes=vmem_limit),
    )(*inputs)

    if has_alpha:
        sum_f = jnp.sum(outs[0])
        sum_a = jnp.sum(outs[1])
    else:
        sum_f = jnp.sum(outs)
        sum_a = jnp.float32(M)                  # alpha == ones

    if size_average:
        # mean over the reference's broadcast (M, 1, M) loss tensor
        return (sum_a / M) * (sum_f / M)
    # sum over the broadcast (M, 1, M) loss tensor
    return sum_a * sum_f


def _reference_focal_loss(x, target, num_class, alpha=None, gamma=2.0,
                          balance_index=-1, smooth=None, size_average=True):
    """Pure-JAX faithful replication of the PyTorch forward (incl. the
    (M, 1, M) broadcasting quirk)."""
    N, C = x.shape[0], x.shape[1]
    logit = jax.nn.softmax(x.astype(jnp.float32), axis=1)
    if x.ndim > 2:
        logit = logit.reshape(N, C, -1).transpose(0, 2, 1).reshape(-1, C)
    tgt = target.reshape(-1, 1).astype(jnp.int32)

    if alpha is None:
        alpha_v = jnp.ones((num_class, 1), dtype=jnp.float32)
    elif isinstance(alpha, float):
        alpha_v = jnp.full((num_class, 1), 1.0 - alpha, dtype=jnp.float32)
        alpha_v = alpha_v.at[balance_index].set(alpha)
    else:
        a = jnp.asarray(alpha, dtype=jnp.float32).reshape(num_class, 1)
        alpha_v = a / jnp.sum(a)

    one_hot = jax.nn.one_hot(tgt[:, 0], num_class, dtype=jnp.float32)
    if smooth is not None:
        one_hot = jnp.clip(one_hot, smooth, 1.0 - smooth)
    eps = 1e-10
    pt = jnp.sum(one_hot * logit, axis=1) + eps            # (M,)
    logpt = jnp.log(pt)
    alpha_g = alpha_v[tgt]                                 # (M, 1, 1) quirk
    loss = -1.0 * alpha_g * ((1.0 - pt) ** gamma) * logpt  # (M, 1, M) broadcast
    return jnp.mean(loss) if size_average else jnp.sum(loss)


if __name__ == "__main__":
    key = jax.random.PRNGKey(0)
    kx, kt, kx2, kt2, kx3, kt3 = jax.random.split(key, 6)

    # Test 1: default config (alpha=None, gamma=2), HW a multiple of 128.
    N, C, H, W = 2, 4, 16, 16
    x = jax.random.normal(kx, (N, C, H, W), dtype=jnp.float32)
    target = jax.random.randint(kt, (N, H, W), 0, C, dtype=jnp.int32)
    loss = jax.block_until_ready(
        focal_loss(x, target, num_class=C, gamma=2.0, size_average=True))
    ref = _reference_focal_loss(x, target, num_class=C, gamma=2.0,
                                size_average=True)
    assert jnp.allclose(loss, ref, rtol=1e-5, atol=1e-6), (loss, ref)

    # Test 2: float alpha + label smoothing + non-integer gamma + HW that is
    # NOT a multiple of 128 (exercises the padded/masked lane path), sum reduction.
    N2, C2, H2, W2 = 2, 4, 15, 15
    x2 = jax.random.normal(kx2, (N2, C2, H2, W2), dtype=jnp.float32)
    target2 = jax.random.randint(kt2, (N2, H2, W2), 0, C2, dtype=jnp.int32)
    loss2 = jax.block_until_ready(
        focal_loss(x2, target2, num_class=C2, alpha=0.25, gamma=1.5,
                   smooth=0.1, size_average=False))
    ref2 = _reference_focal_loss(x2, target2, num_class=C2, alpha=0.25,
                                 gamma=1.5, smooth=0.1, size_average=False)
    assert jnp.allclose(loss2, ref2, rtol=1e-5, atol=1e-5), (loss2, ref2)

    # Test 3: 2D (N, C) input, exercises the nb==1 split-parallel grid path.
    N3, C3 = 512, 4
    x3 = jax.random.normal(kx3, (N3, C3), dtype=jnp.float32)
    target3 = jax.random.randint(kt3, (N3,), 0, C3, dtype=jnp.int32)
    loss3 = jax.block_until_ready(
        focal_loss(x3, target3, num_class=C3, gamma=2.0, size_average=True))
    ref3 = _reference_focal_loss(x3, target3, num_class=C3, gamma=2.0,
                                 size_average=True)
    assert jnp.allclose(loss3, ref3, rtol=1e-5, atol=1e-6), (loss3, ref3)

    print("KERNEL_OK")
</pallas_src>

<mosaic_0001>
module attributes {stable_mosaic.version = 11 : i64} {
  func.func @_focal_loss_kernel(%arg0: i32, %arg1: i32, %arg2: memref<1x1x256xi32, #tpu.memory_space<vmem>>, %arg3: memref<1x4x256xf32, #tpu.memory_space<vmem>>, %arg4: memref<1x1x1xf32, #tpu.memory_space<vmem>>, %arg5: memref<1x256xf32, #tpu.memory_space<vmem>>) attributes {dimension_semantics = [#tpu.dimension_semantics<parallel>, #tpu.dimension_semantics<arbitrary>], iteration_bounds = array<i64: 2, 1>, scalar_prefetch = 0 : i64, scratch_operands = 1 : i64, tpu.core_type = #tpu.core_type<tc>, window_params = [{transform_indices = @transform_0, window_bounds = array<i64: 1, 1, 256>}, {transform_indices = @transform_1, window_bounds = array<i64: 1, 4, 256>}, {transform_indices = @transform_2, window_bounds = array<i64: 1, 1, 1>}]} {
    %c0_i32 = arith.constant 0 : i32
    %0 = arith.cmpi eq, %arg1, %c0_i32 : i32
    %1 = arith.extui %0 : i1 to i32
    %c0_i32_0 = arith.constant 0 : i32
    %2 = arith.cmpi ne, %1, %c0_i32_0 : i32
    scf.if %2 {
      %cst_18 = arith.constant 0.000000e+00 : f32
      %41 = vector.broadcast %cst_18 : f32 to vector<1x256xf32>
      %c0_19 = arith.constant 0 : index
      %c0_20 = arith.constant 0 : index
      %42 = vector.load %arg5[%c0_19, %c0_20] : memref<1x256xf32, #tpu.memory_space<vmem>>, vector<1x256xf32>
      tpu.vector_store %arg5[%c0_19, %c0_20], %41 {strides = array<i32>} : memref<1x256xf32, #tpu.memory_space<vmem>>, vector<1x256xf32>,
    } else {
    }
    %c0 = arith.constant 0 : index
    %c0_1 = arith.constant 0 : index
    %c0_2 = arith.constant 0 : index
    %3 = vector.load %arg3[%c0, %c0_1, %c0_2] : memref<1x4x256xf32, #tpu.memory_space<vmem>>, vector<1x4x256xf32>
    %4 = vector.shape_cast %3 : vector<1x4x256xf32> to vector<4x256xf32>
    %c0_3 = arith.constant 0 : index
    %c0_4 = arith.constant 0 : index
    %c0_5 = arith.constant 0 : index
    %5 = vector.load %arg2[%c0_3, %c0_4, %c0_5] : memref<1x1x256xi32, #tpu.memory_space<vmem>>, vector<1x1x256xi32>
    %6 = vector.shape_cast %5 : vector<1x1x256xi32> to vector<1x256xi32>
    %7 = tpu.iota {dimensions = array<i32: 0>} : vector<4x1xi32>
    %8 = vector.broadcast %7 : vector<4x1xi32> to vector<4x256xi32>
    %9 = vector.broadcast %6 : vector<1x256xi32> to vector<4x256xi32>
    %10 = arith.cmpi eq, %8, %9 : vector<4x256xi32>
    %cst = arith.constant dense<0xFF800000> : vector<256xf32>
    %11 = vector.multi_reduction <maximumf>, %4, %cst [0] : vector<4x256xf32> to vector<256xf32>
    %12 = vector.shape_cast %11 : vector<256xf32> to vector<1x256xf32>
    %13 = vector.broadcast %12 : vector<1x256xf32> to vector<4x256xf32>
    %14 = arith.subf %4, %13 : vector<4x256xf32>
    %15 = math.exp %14 : vector<4x256xf32>
    %cst_6 = arith.constant dense<0.000000e+00> : vector<256xf32>
    %16 = vector.multi_reduction <add>, %15, %cst_6 [0] : vector<4x256xf32> to vector<256xf32>
    %17 = vector.shape_cast %16 : vector<256xf32> to vector<1x256xf32>
    %18 = math.log %17 : vector<1x256xf32>
    %19 = arith.addf %12, %18 : vector<1x256xf32>
    %cst_7 = arith.constant 0.000000e+00 : f32
    %20 = vector.broadcast %cst_7 : f32 to vector<4x256xf32>
    %21 = arith.select %10, %4, %20 : vector<4x256xi1>, vector<4x256xf32>
    %cst_8 = arith.constant dense<0.000000e+00> : vector<256xf32>
    %22 = vector.multi_reduction <add>, %21, %cst_8 [0] : vector<4x256xf32> to vector<256xf32>
    %23 = vector.shape_cast %22 : vector<256xf32> to vector<1x256xf32>
    %24 = arith.subf %23, %19 : vector<1x256xf32>
    %25 = math.exp %24 : vector<1x256xf32>
    %cst_9 = arith.constant 1.000000e-10 : f32
    %26 = vector.broadcast %cst_9 : f32 to vector<1x256xf32>
    %27 = arith.addf %25, %26 : vector<1x256xf32>
    %28 = math.log %27 : vector<1x256xf32>
    %cst_10 = arith.constant 1.000000e+00 : f32
    %29 = vector.broadcast %cst_10 : f32 to vector<1x256xf32>
    %30 = arith.subf %29, %27 : vector<1x256xf32>
    %31 = arith.mulf %30, %30 : vector<1x256xf32>
    %cst_11 = arith.constant 0.000000e+00 : f32
    %32 = vector.broadcast %cst_11 : f32 to vector<1x256xf32>
    %33 = arith.subf %32, %31 : vector<1x256xf32>
    %34 = arith.mulf %33, %28 : vector<1x256xf32>
    %c0_12 = arith.constant 0 : index
    %c0_13 = arith.constant 0 : index
    %35 = vector.load %arg5[%c0_12, %c0_13] : memref<1x256xf32, #tpu.memory_space<vmem>>, vector<1x256xf32>
    %36 = arith.addf %35, %34 : vector<1x256xf32>
    %c0_14 = arith.constant 0 : index
    %c0_15 = arith.constant 0 : index
    %37 = vector.load %arg5[%c0_14, %c0_15] : memref<1x256xf32, #tpu.memory_space<vmem>>, vector<1x256xf32>
    tpu.vector_store %arg5[%c0_14, %c0_15], %36 {strides = array<i32>} : memref<1x256xf32, #tpu.memory_space<vmem>>, vector<1x256xf32>,
    %c0_i32_16 = arith.constant 0 : i32
    %38 = arith.cmpi eq, %arg1, %c0_i32_16 : i32
    %39 = arith.extui %38 : i1 to i32
    %c0_i32_17 = arith.constant 0 : i32
    %40 = arith.cmpi ne, %39, %c0_i32_17 : i32
    scf.if %40 {
      %c0_18 = arith.constant 0 : index
      %c0_19 = arith.constant 0 : index
      %41 = vector.load %arg5[%c0_18, %c0_19] : memref<1x256xf32, #tpu.memory_space<vmem>>, vector<1x256xf32>
      %42 = vector.shape_cast %41 : vector<1x256xf32> to vector<1x1x256xf32>
      %cst_20 = arith.constant dense<0.000000e+00> : vector<1xf32>
      %43 = vector.multi_reduction <add>, %42, %cst_20 [1, 2] : vector<1x1x256xf32> to vector<1xf32>
      %44 = vector.shape_cast %43 : vector<1xf32> to vector<1x1x1xf32>
      %45 = vector.extract %44[0, 0, 0] : f32 from vector<1x1x1xf32>
      %46 = vector.broadcast %45 : f32 to vector<1x1xf32>
      %c0_21 = arith.constant 0 : index
      %c0_22 = arith.constant 0 : index
      %c0_23 = arith.constant 0 : index
      %47 = vector.load %arg4[%c0_21, %c0_22, %c0_23] : memref<1x1x1xf32, #tpu.memory_space<vmem>>, vector<1x1x1xf32>
      %48 = vector.shape_cast %47 : vector<1x1x1xf32> to vector<1x1xf32>
      %49 = vector.shape_cast %46 : vector<1x1xf32> to vector<1x1x1xf32>
      tpu.vector_store %arg4[%c0_21, %c0_22, %c0_23], %49 {strides = array<i32>} : memref<1x1x1xf32, #tpu.memory_space<vmem>>, vector<1x1x1xf32>,
    } else {
    }
    return
  }
  func.func @transform_0(%arg0: i32, %arg1: i32) -> (i32, i32, i32) {
    %c0_i32 = arith.constant 0 : i32
    %c0_i32_0 = arith.constant 0 : i32
    return %arg0, %c0_i32, %arg1 : i32, i32, i32
  }
  func.func @transform_1(%arg0: i32, %arg1: i32) -> (i32, i32, i32) {
    %c0_i32 = arith.constant 0 : i32
    %c0_i32_0 = arith.constant 0 : i32
    return %arg0, %c0_i32, %arg1 : i32, i32, i32
  }
  func.func @transform_2(%arg0: i32, %arg1: i32) -> (i32, i32, i32) {
    %c0_i32 = arith.constant 0 : i32
    %c0_i32_0 = arith.constant 0 : i32
    %c0_i32_1 = arith.constant 0 : i32
    return %arg0, %c0_i32, %c0_i32_0 : i32, i32, i32
  }
}

</mosaic_0001>

<llo_original>
// kernel: tpu_custom_call.1
$region0: #{tpu_custom_call.1}
  #allocation0 [shape = 'u32[]', space=smem, size = 0x4, offset = 0x4, fixed_abs, tag = 'smem constant byte address 0x4 - core index']
  #allocation1 [shape = 'u32[72,128]{1,0:T(1,128)}', space=vmem, size = 0x9000, scoped, tag = 'internal scratch']
  #allocation2 [shape = 'f32[1,256]{1,0:T(1,128)}', space=vmem, size = 0x400, scoped, tag = 'scratch operand']
  %s0 = inlined_call_operand.hbm [shape: s32[2,1,256], index: 0, kind: input, shape index: {}]
  %s1 = inlined_call_operand.hbm [shape: f32[2,4,256], index: 1, kind: input, shape index: {}]
  %s2 = inlined_call_operand.vmem [shape: f32[2,1,1], index: 2, kind: output, shape index: {}]
  %s3 = sld [smem:[#allocation0]]
  $region57: #{tpu_custom_call.1} parent=0
    _
  %s5 = ssub.s32 1, %s3
  %s6 = scalar_select 0, %s5, %s3
  $region1: #{tpu_custom_call.1} parent=0
    #allocation3 [shape = 'u8[2048]{0}', space=vmem, size = 0x800, scoped, tag = 'input window, operand 0']
    #allocation4 [shape = 's32[2]{0}', space=sflag, size = 0x8, scoped, tag = 'scoped memory for tpu_custom_call.1']
    #allocation5 [shape = 'u8[8192]{0}', space=vmem, size = 0x2000, scoped, tag = 'input window, operand 1']
    #allocation6 [shape = 's32[2]{0}', space=sflag, size = 0x8, scoped, tag = 'scoped memory for tpu_custom_call.1']
    %7 = vsyncpa [#allocation4], 0
    %s8 = scalar_lea.sflag [#allocation4], 1
    %9 = vsyncpa %s8, 0
    %10 = vsyncpa [#allocation6], 0
    %s11 = scalar_lea.sflag [#allocation6], 1
    %12 = vsyncpa %s11, 0
    loop: start=0, step=1, limit=4
    $region2: #{tpu_custom_call.1} parent=1 // loop_pre_header
      _
    $region3: #{tpu_custom_call.1} parent=1 // loop_header
      %s14 = sphi 0, %s18
      %p15 = scmp.ge.s32.totalorder %s14, 4
      %s21 = sphi 0, %s33
      %s22 = sphi 0, %s29
      %s23 = sphi 0, %s21
      %s24 = sphi 0, %s22
      %s25 = sphi 0, %s23
      %s26 = sphi 0, %s24
      %s38 = sphi 0, %s40
      %s41 = sphi 0, %s38
      %s42 = sphi 0, %s41
      %s58 = sphi 0, %s42
      %s66 = sphi 0, %s68
      %s69 = sphi 0, %s66
      %s70 = sphi 0, %s69
      %s86 = sphi 0, %s70
      %s92 = sphi 0, %s94
      %s95 = sphi 0, %s92
      %s96 = sphi 0, %s95
      %s112 = sphi 0, %s96
    $region4: #{tpu_custom_call.1} parent=1 // loop_header_branch
      %17 = sbr.rel (%p15) target = $region8
    $region5: #{tpu_custom_call.1} parent=1 // loop_body
      %s19 = ssub.s32 %s14, 1
      %s20 = ssub.s32 %s14, 2
      %s27 = sadd.s32 1, %s22
      %p28 = scmp.ge.s32.totalorder %s27, 1
      %s29 = scalar_select %p28, 0, %s27
      %s30 = sadd.s32 1, %s21
      %s31 = scalar_select %p28, %s30, %s21
      %p32 = scmp.ge.s32.totalorder %s31, 2
      %s33 = scalar_select %p32, 0, %s31
      %s34 = ssub.s32 %s21, %s33
      %s35 = ssub.s32 %s22, %s29
      %s36 = sor.u32 %s34, %s35
      %p37 = scmp.eq.s32.totalorder %s36, 0
      %s39 = sadd.s32 %s38, 1
      %s40 = scalar_select %p37, %s38, %s39
      %p43 = pneg %p37
      %p44 = scmp.eq.s32.totalorder %s14, 1
      %p45 = por %p43, %p44
      %p46 = scmp.ne.s32.totalorder %s38, %s41
      %p47 = scmp.eq.s32.totalorder %s14, 0
      %p48 = por %p46, %p47
      %p49 = scmp.ne.s32.totalorder %s38, %s41
      %p50 = scmp.eq.s32.totalorder %s19, 1
      %p51 = por %p49, %p50
      %p52 = scmp.ne.s32.totalorder %s41, %s42
      %p53 = scmp.eq.s32.totalorder %s19, 0
      %p54 = por %p52, %p53
      %p55 = scmp.ne.s32.totalorder %s41, %s42
      %p56 = scmp.eq.s32.totalorder %s20, 1
      %p57 = por %p55, %p56
      %p59 = scmp.ne.s32.totalorder %s42, %s58
      %p60 = scmp.eq.s32.totalorder %s20, 0
      %p61 = por %p59, %p60
      %s62 = ssub.s32 %s21, %s33
      %s63 = ssub.s32 %s22, %s29
      %s64 = sor.u32 %s62, %s63
      %p65 = scmp.eq.s32.totalorder %s64, 0
      %s67 = sadd.s32 %s66, 1
      %s68 = scalar_select %p65, %s66, %s67
      %p71 = pneg %p65
      %p72 = scmp.eq.s32.totalorder %s14, 1
      %p73 = por %p71, %p72
      %p74 = scmp.ne.s32.totalorder %s66, %s69
      %p75 = scmp.eq.s32.totalorder %s14, 0
      %p76 = por %p74, %p75
      %p77 = scmp.ne.s32.totalorder %s66, %s69
      %p78 = scmp.eq.s32.totalorder %s19, 1
      %p79 = por %p77, %p78
      %p80 = scmp.ne.s32.totalorder %s69, %s70
      %p81 = scmp.eq.s32.totalorder %s19, 0
      %p82 = por %p80, %p81
      %p83 = scmp.ne.s32.totalorder %s69, %s70
      %p84 = scmp.eq.s32.totalorder %s20, 1
      %p85 = por %p83, %p84
      %p87 = scmp.ne.s32.totalorder %s70, %s86
      %p88 = scmp.eq.s32.totalorder %s20, 0
      %p89 = por %p87, %p88
      %s90 = ssub.s32 %s21, %s33
      %p91 = scmp.eq.s32.totalorder %s90, 0
      %s93 = sadd.s32 %s92, 1
      %s94 = scalar_select %p91, %s92, %s93
      %p97 = pneg %p91
      %p98 = scmp.eq.s32.totalorder %s14, 1
      %p99 = por %p97, %p98
      %p100 = scmp.ne.s32.totalorder %s92, %s95
      %p101 = scmp.eq.s32.totalorder %s14, 0
      %p102 = por %p100, %p101
      %p103 = scmp.ne.s32.totalorder %s92, %s95
      %p104 = scmp.eq.s32.totalorder %s19, 1
      %p105 = por %p103, %p104
      %p106 = scmp.ne.s32.totalorder %s95, %s96
      %p107 = scmp.eq.s32.totalorder %s19, 0
      %p108 = por %p106, %p107
      %p109 = scmp.ne.s32.totalorder %s95, %s96
      %p110 = scmp.eq.s32.totalorder %s20, 1
      %p111 = por %p109, %p110
      %p113 = scmp.ne.s32.totalorder %s96, %s112
      %p114 = scmp.eq.s32.totalorder %s20, 0
      %p115 = por %p113, %p114
      %p116 = scmp.le.s32.totalorder 1, %s14
      %p117 = scmp.lt.s32.totalorder %s14, 3
      %p118 = pnand %p116, %p117
      %p119 = pneg %p118
      // Predicated region
      $region9: #{tpu_custom_call.1} parent=5 // pred_check
        _
      $region10: #{tpu_custom_call.1} parent=5 // pred_check_branch
        %121 = sbr.rel (%p118) target = $region12
      $region11: #{tpu_custom_call.1} parent=5 // pred_region
        %s122 = ssub.s32 %s14, 1
      $region12: #{tpu_custom_call.1} parent=5 // pred_fallthru
        _
      %p123 = scmp.lt.s32.totalorder %s14, 2
      // Predicated region
      $region13: #{tpu_custom_call.1} parent=5 // pred_check
        %p124 = pneg %p123
      $region14: #{tpu_custom_call.1} parent=5 // pred_check_branch
        %126 = sbr.rel (%p124) target = $region16
      $region15: #{tpu_custom_call.1} parent=5 // pred_region
        // Predicated region
        $region17: #{tpu_custom_call.1} parent=15 // pred_check
          %p127 = pneg %p48
        $region18: #{tpu_custom_call.1} parent=15 // pred_check_branch
          %129 = sbr.rel (%p127) target = $region20
        $region19: #{tpu_custom_call.1} parent=15 // pred_region
          %s130 = sand.u32 %s38, 1
          %s131 = scalar_lea.sflag [#allocation4], %s130
          %s132 = sand.u32 %s38, 1
          %s133 = smul.addr %s132, 2
          %s134 = scalar_lea.vmem [#allocation3], %s133
          %s135 = smul.u32 2, %s22
          %137 = vsyncadd %s131, 0
          %s138 = smul.addr %s21, 2
          %s139 = sadd.s32 %s135, %s138
          %s140 = scalar_lea.hbm %s0, %s139
          %s142 = sshll.u32 %s140, 4
          %s143 = int_to_ptr.hbm [resolvable:$true] %s142
          %s144 = sshll.u32 %s134, 4
          %s145 = int_to_ptr.vmem [resolvable:$true] %s144
          %147 = dma.hbm_to_vmem [thread:$0]  %s143, 32, %s145, %s131
        $region20: #{tpu_custom_call.1} parent=15 // pred_fallthru
          _
        // Predicated region
        $region21: #{tpu_custom_call.1} parent=15 // pred_check
          %p148 = pneg %p76
        $region22: #{tpu_custom_call.1} parent=15 // pred_check_branch
          %150 = sbr.rel (%p148) target = $region24
        $region23: #{tpu_custom_call.1} parent=15 // pred_region
          %s151 = sand.u32 %s66, 1
          %s152 = scalar_lea.sflag [#allocation6], %s151
          %s153 = sand.u32 %s66, 1
          %s154 = smul.addr %s153, 8
          %s155 = scalar_lea.vmem [#allocation5], %s154
          %s156 = smul.u32 2, %s22
          %158 = vsyncadd %s152, 0
          %s159 = smul.addr %s21, 2
          %s160 = sadd.s32 %s156, %s159
          %s161 = smul.addr %s160, 4
          %s162 = scalar_lea.hbm %s1, %s161
          %s164 = sshll.u32 %s162, 4
          %s165 = int_to_ptr.hbm [resolvable:$true] %s164
          %s166 = sshll.u32 %s155, 4
          %s167 = int_to_ptr.vmem [resolvable:$true] %s166
          %169 = dma.hbm_to_vmem [thread:$0]  %s165, 128, %s167, %s152
        $region24: #{tpu_custom_call.1} parent=15 // pred_fallthru
          _
      $region16: #{tpu_custom_call.1} parent=5 // pred_fallthru
        _
      %p170 = scmp.le.s32.totalorder 1, %s14
      %p171 = scmp.lt.s32.totalorder %s14, 3
      %p172 = pnand %p170, %p171
      %p173 = pneg %p172
      // Predicated region
      $region25: #{tpu_custom_call.1} parent=5 // pred_check
        _
      $region26: #{tpu_custom_call.1} parent=5 // pred_check_branch
        %175 = sbr.rel (%p172) target = $region28
      $region27: #{tpu_custom_call.1} parent=5 // pred_region
        %s176 = ssub.s32 %s14, 1
        %s177 = sand.u32 %s41, 1
        %s178 = scalar_lea.sflag [#allocation4], %s177
        %s179 = sand.u32 %s41, 1
        %s180 = smul.addr %s179, 2
        %s181 = scalar_lea.vmem [#allocation3], %s180
        // Predicated region
        $region29: #{tpu_custom_call.1} parent=27 // pred_check
          %p182 = pneg %p54
        $region30: #{tpu_custom_call.1} parent=27 // pred_check_branch
          %184 = sbr.rel (%p182) target = $region32
        $region31: #{tpu_custom_call.1} parent=27 // pred_region
          %186 = dma.done %s178, 32
        $region32: #{tpu_custom_call.1} parent=27 // pred_fallthru
          _
        %s187 = sand.u32 %s69, 1
        %s188 = scalar_lea.sflag [#allocation6], %s187
        %s189 = sand.u32 %s69, 1
        %s190 = smul.addr %s189, 8
        %s191 = scalar_lea.vmem [#allocation5], %s190
        // Predicated region
        $region33: #{tpu_custom_call.1} parent=27 // pred_check
          %p192 = pneg %p82
        $region34: #{tpu_custom_call.1} parent=27 // pred_check_branch
          %194 = sbr.rel (%p192) target = $region36
        $region35: #{tpu_custom_call.1} parent=27 // pred_region
          %196 = dma.done %s188, 128
        $region36: #{tpu_custom_call.1} parent=27 // pred_fallthru
          _
        %s197 = sand.u32 %s41, 1
        %s198 = scalar_lea.sflag [#allocation4], %s197
        %s199 = sand.u32 %s41, 1
        %s200 = smul.addr %s199, 2
        %s201 = scalar_lea.vmem [#allocation3], %s200
        %p202 = pneg %p54
        %p203 = pneg %p51
        %s204 = sand.u32 %s69, 1
        %s205 = scalar_lea.sflag [#allocation6], %s204
        %s206 = sand.u32 %s69, 1
        %s207 = smul.addr %s206, 8
        %s208 = scalar_lea.vmem [#allocation5], %s207
        %p209 = pneg %p82
        %p210 = pneg %p79
        %p211 = pneg %p108
        %p212 = pneg %p105
        %p213 = scmp.lt.s32.totalorder %s23, 1
        %s214 = scalar_select %p213, %s23, 1
        %s215 = scalar_lea.vmem %s2, %s214
        %s216 = smul.u32 2, %s24
        %s217 = smul.u32 2, %s24
        %p218 = scmp.lt.s32.totalorder %s23, 1
        %s219 = scalar_select %p218, %s23, 1
        %s220 = scalar_lea.vmem %s2, %s219
        %p221 = scmp.eq.s32.totalorder %s24, 0
        // Predicated region
        $region37: #{tpu_custom_call.1} parent=27 // pred_check
          %p222 = pneg %p221
        $region38: #{tpu_custom_call.1} parent=27 // pred_check_branch
          %224 = sbr.rel (%p222) target = $region40
        $region39: #{tpu_custom_call.1} parent=27 // pred_region
          %v225 = vlaneseq
          %vm226 = vcmp.ge.s32.totalorder %v225, 0
          %vm227 = vcmp.lt.s32.totalorder %v225, 256
          %vm228 = vmand %vm226, %vm227
          %229 = vst.msk [vmem:[#allocation2] sm:$0x3] %vm228, 0.0
        $region40: #{tpu_custom_call.1} parent=27 // pred_fallthru
          _
        %v230 = vld [vmem:[%s191] sm:$0xff]
        %v231 = vld [vmem:[%s181] sm:$0x3]
        %v232 = vlaneseq
        %v233 = vshrl.u32 %v232, 7
        %v234 = vperm.slane %v231, 0
        %v235 = vperm.slane %v231, 1
        %vm236 = vcmp.eq.s32.totalorder %v233, %v234
        %vm237 = vcmp.eq.s32.totalorder %v233, %v235
        %239 = vst [vmem:[#allocation1] ss:$2 sm:$0xff] %v230
        %v240 = vld.sshfl [vmem:[#allocation1] sm:$0xff pattern:$0x75316420]
        %v241 = vld.sshfl [vmem:[#allocation1 + $0x8] sm:$0xff pattern:$0x75316420]
        %vm244 = vcmask 1043456
        %v245 = vsel %vm244, %v240, -inf
        %v246 = vrot.slane %v245, 4
        %v247 = vmax.f32 %v245, %v246
        %v248 = vrot.slane %v247, 2
        %v249 = vmax.f32 %v247, %v248
        %v250 = vrot.slane %v249, 1
        %v251 = vmax.f32 %v249, %v250
        %v252 = vsel %vm244, %v241, -inf
        %v253 = vrot.slane %v252, 4
        %v254 = vmax.f32 %v252, %v253
        %v255 = vrot.slane %v254, 2
        %v256 = vmax.f32 %v254, %v255
        %v257 = vrot.slane %v256, 1
        %v258 = vmax.f32 %v256, %v257
        %v261 = vrot.slane %v258, 4
        %v262 = vsel %vm244, %v251, %v261
        %v264 = vsub.f32 %v230, %v262
        %v265 = vmul.f32 %v264, 1.442695
        %v266 = vpow.pop %v265
        %268 = vst [vmem:[#allocation1] ss:$2 sm:$0xff] %v266
        %v269 = vld.sshfl [vmem:[#allocation1] sm:$0xff pattern:$0x75316420]
        %v270 = vld.sshfl [vmem:[#allocation1 + $0x8] sm:$0xff pattern:$0x75316420]
        %v273 = vsel %vm244, %v269, 0.0
        %v274 = vrot.slane %v273, 4
        %v275 = vadd.f32 %v273, %v274
        %v276 = vrot.slane %v275, 2
        %v277 = vadd.f32 %v275, %v276
        %v278 = vrot.slane %v277, 1
        %v279 = vadd.f32 %v277, %v278
        %v280 = vsel %vm244, %v270, 0.0
        %v281 = vrot.slane %v280, 4
        %v282 = vadd.f32 %v280, %v281
        %v283 = vrot.slane %v282, 2
        %v284 = vadd.f32 %v282, %v283
        %v285 = vrot.slane %v284, 1
        %v286 = vadd.f32 %v284, %v285
        %v287 = vlog2.pop %v279
        %v288 = vmul.f32 %v287, 0.6931472
        %v289 = vlog2.pop %v286
        %v290 = vmul.f32 %v289, 0.6931472
        %v291 = vadd.f32 %v251, %v288
        %v292 = vadd.f32 %v258, %v290
        %293 = vst [vmem:[#allocation1] ss:$2 sm:$0xff] %v230
        %v294 = vld.sshfl [vmem:[#allocation1] sm:$0xff pattern:$0x75316420]
        %v295 = vld.sshfl [vmem:[#allocation1 + $0x8] sm:$0xff pattern:$0x75316420]
        %v298 = vsel %vm236, %v294, 0.0
        %v299 = vsel %vm237, %v295, 0.0
        %v300 = vsel %vm244, %v298, 0.0
        %v301 = vrot.slane %v300, 4
        %v302 = vadd.f32 %v300, %v301
        %v303 = vrot.slane %v302, 2
        %v304 = vadd.f32 %v302, %v303
        %v305 = vrot.slane %v304, 1
        %v306 = vadd.f32 %v304, %v305
        %v307 = vsel %vm244, %v299, 0.0
        %v308 = vrot.slane %v307, 4
        %v309 = vadd.f32 %v307, %v308
        %v310 = vrot.slane %v309, 2
        %v311 = vadd.f32 %v309, %v310
        %v312 = vrot.slane %v311, 1
        %v313 = vadd.f32 %v311, %v312
        %v314 = vsub.f32 %v306, %v291
        %v315 = vsub.f32 %v313, %v292
        %v316 = vmul.f32 %v314, 1.442695
        %v317 = vpow.pop %v316
        %v318 = vmul.f32 %v315, 1.442695
        %v319 = vpow.pop %v318
        %v320 = vadd.f32 %v317, 1e-10
        %v321 = vadd.f32 %v319, 1e-10
        %v322 = vlog2.pop %v320
        %v323 = vmul.f32 %v322, 0.6931472
        %v324 = vlog2.pop %v321
        %v325 = vmul.f32 %v324, 0.6931472
        %v326 = vsub.f32 1.0, %v320
        %v327 = vsub.f32 1.0, %v321
        %v328 = vmul.f32 %v326, %v326
        %v329 = vmul.f32 %v327, %v327
        %v330 = vsub.f32 0.0, %v328
        %v331 = vsub.f32 0.0, %v329
        %v332 = vmul.f32 %v330, %v323
        %v333 = vmul.f32 %v331, %v325
        %v334 = vld [vmem:[#allocation2] sm:$0x3]
        %v337 = vrot.slane %v333, 7
        %vm338 = vcmask 1040384
        %v339 = vsel %vm338, %v332, %v337
        %v341 = vadd.f32 %v334, %v339
        %v342 = vlaneseq
        %vm343 = vcmp.ge.s32.totalorder %v342, 0
        %vm344 = vcmp.lt.s32.totalorder %v342, 256
        %vm345 = vmand %vm343, %vm344
        %346 = vst.msk [vmem:[#allocation2] sm:$0x3] %vm345, %v341
        // Predicated region
        $region41: #{tpu_custom_call.1} parent=27 // pred_check
          %p347 = pneg %p221
        $region42: #{tpu_custom_call.1} parent=27 // pred_check_branch
          %349 = sbr.rel (%p347) target = $region44
        $region43: #{tpu_custom_call.1} parent=27 // pred_region
          %v350 = vld [vmem:[#allocation2] sm:$0x3]
          %v352 = vperm.slane %v350, 0
          %v353 = vperm.slane %v350, 1
          %v356 = vsel %vm338, %v352, 0.0
          %v357 = vsel %vm338, %v353, 0.0
          %v358 = vadd.f32 %v356, %v357
          %359 = vadd.xlane.f32.xlu0 %v358
          %v360 = vpop.xlane.xlu0 %359
          %v361 = vrot.slane %v360, 4
          %v362 = vadd.f32 %v360, %v361
          %v363 = vrot.slane %v362, 2
          %v364 = vadd.f32 %v362, %v363
          %v365 = vrot.slane %v364, 1
          %v366 = vadd.f32 %v364, %v365
          %s367 = vtos %v366
          %v368 = vstv %s367
          %vm369 = vcmask 0
          %370 = vst.msk [vmem:[%s220] sm:$0x1] %vm369, %v368
        $region44: #{tpu_custom_call.1} parent=27 // pred_fallthru
          _
        %p371 = scmp.lt.s32.totalorder %s23, 1
        %s372 = scalar_select %p371, %s23, 1
        %s373 = scalar_lea.vmem %s2, %s372
        // Predicated region
        $region45: #{tpu_custom_call.1} parent=27 // pred_check
          %p374 = pneg %p105
        $region46: #{tpu_custom_call.1} parent=27 // pred_check_branch
          %376 = sbr.rel (%p374) target = $region48
        $region47: #{tpu_custom_call.1} parent=27 // pred_region
          _
        $region48: #{tpu_custom_call.1} parent=27 // pred_fallthru
          _
      $region28: #{tpu_custom_call.1} parent=5 // pred_fallthru
        _
      %p377 = scmp.le.s32.totalorder 2, %s14
      // Predicated region
      $region49: #{tpu_custom_call.1} parent=5 // pred_check
        %p378 = pneg %p377
      $region50: #{tpu_custom_call.1} parent=5 // pred_check_branch
        %380 = sbr.rel (%p378) target = $region52
      $region51: #{tpu_custom_call.1} parent=5 // pred_region
        %s381 = ssub.s32 %s14, 2
        // Predicated region
        $region53: #{tpu_custom_call.1} parent=51 // pred_check
          %p382 = pneg %p111
        $region54: #{tpu_custom_call.1} parent=51 // pred_check_branch
          %384 = sbr.rel (%p382) target = $region56
        $region55: #{tpu_custom_call.1} parent=51 // pred_region
          %p385 = scmp.lt.s32.totalorder %s25, 1
          %s386 = scalar_select %p385, %s25, 1
          %s387 = scalar_lea.vmem %s2, %s386
        $region56: #{tpu_custom_call.1} parent=51 // pred_fallthru
          _
      $region52: #{tpu_custom_call.1} parent=5 // pred_fallthru
        _
    $region6: #{tpu_custom_call.1} parent=1 // loop_footer
      %s18 = sadd.s32 1, %s14
    $region7: #{tpu_custom_call.1} parent=1 // loop_footer_branch
      %13 = sbr.rel target = $region3
    $region8: #{tpu_custom_call.1} parent=1 // loop_exit
      _
    %388 = vsyncpa [#allocation4], 1
    %s389 = scalar_lea.sflag [#allocation4], 1
    %390 = vsyncpa %s389, 1
    %391 = vsyncpa [#allocation6], 1
    %s392 = scalar_lea.sflag [#allocation6], 1
    %393 = vsyncpa %s392, 1

</llo_original>
